<compile_context>
chip_gen: v7x
topology: tpu7x:2x2x1
jax: 0.10.0
libtpu: 0.0.40
codegen_flags: <defaults>
</compile_context>

<pallas_src>
import functools

import jax
import jax.numpy as jnp
from jax.experimental import pallas as pl
from jax.experimental.pallas import tpu as pltpu


def _choose_tile_b(B_pad, in_dim, to_z_dim, max_feat, io_itemsize, weight_bytes,
                   vmem_budget=10 * 1024 * 1024):
    """Largest lane-dense batch tile (multiple of 128, divides B_pad) that fits a
    conservative VMEM budget and leaves >=2 (ideally >=4) grid steps for megacore."""
    budget = max(vmem_budget - 2 * weight_bytes, 1 << 20)  # residents are double-buffered
    # Per batch column: double-buffered streamed blocks (z, eps, fused out) +
    # rough compute temporaries (f32 acc + bf16 activations per live layer).
    stream = 2 * (in_dim * io_itemsize + to_z_dim * io_itemsize + 3 * to_z_dim * 4)
    temps = 8 * max_feat * 4
    cap = (budget // (stream + temps)) // 128 * 128
    cap = int(max(128, min(cap, 2048, B_pad)))
    # Keep grid >= 2 (>= 4 when possible) so v7x's second TensorCore is used.
    if B_pad >= 4 * 128:
        cap = min(cap, max(128, (B_pad // 4) // 128 * 128))
    elif B_pad >= 2 * 128:
        cap = min(cap, max(128, (B_pad // 2) // 128 * 128))
    t = cap
    while B_pad % t:          # B_pad is a multiple of 128, so this terminates at 128
        t -= 128
    return t


def _make_kernel(num_layers, to_z_dim):
    """Fused MLP + reparameterized-sample kernel body (one batch tile per step).

    All tensors are feature-major: (features, TILE_B), batch on the 128-lane axis.
    """
    n_params = 2 * (num_layers + 1)

    def kernel(*refs):
        z_ref = refs[0]                       # (in_dim, TILE_B)
        p_refs = refs[1:1 + n_params]         # resident (W, b) pairs
        eps_ref = refs[1 + n_params]          # (to_z_dim, TILE_B)
        out_ref = refs[2 + n_params]          # (3*to_z_dim, TILE_B) f32, fused

        h = z_ref[...].astype(jnp.bfloat16)   # bf16 MXU operand

        for l in range(num_layers):
            w = p_refs[2 * l][...]            # (out, in) bf16, VMEM-resident
            b = p_refs[2 * l + 1][...]        # (out, 1)  f32, lane-broadcast
            acc = jnp.dot(w, h, preferred_element_type=jnp.float32) + b
            h = acc.astype(jnp.bfloat16)
            h = jnp.where(h >= 0, h, 0.2 * h)  # LeakyReLU(0.2) in bf16 (VALU)

        w_out = p_refs[2 * num_layers][...]       # (2*to_z_dim, nif) bf16
        b_out = p_refs[2 * num_layers + 1][...]   # (2*to_z_dim, 1)  f32
        logits = jnp.dot(w_out, h, preferred_element_type=jnp.float32) + b_out

        mu = logits[:to_z_dim, :]             # sublane slices — cheap in this layout
        log_sig = logits[to_z_dim:, :]
        eps = eps_ref[...].astype(jnp.float32)
        zi = mu + jnp.exp(log_sig) * eps      # rsample: mu + exp(log_sig) * eps

        # Fused output: rows [0:2T) = (mu, log_sig) = logits, rows [2T:3T) = zi.
        out_ref[...] = jnp.concatenate([logits, zi], axis=0)

    return kernel


@functools.partial(jax.jit, static_argnames=("num_layers", "to_z_dim"))
def net_izi_mlp_forward(z, params, eps, *, num_layers, to_z_dim):
    """Run the fused Pallas kernel.

    z:      (B, input_z_dim) f32 (or bf16)
    params: flat tuple from prepare_params():
            (W1, b1, ..., WL, bL, W_out, b_out) with W bf16 (out, in), b f32 (out, 1)
    eps:    (B, to_z_dim) f32 standard-normal noise
    returns (mu, log_sig, zi), each (B, to_z_dim) f32
    """
    B, in_dim = z.shape

    # Pad the batch to a multiple of 128 so it is lane-dense, then go feature-major.
    B_pad = ((B + 127) // 128) * 128
    pad = B_pad - B
    z_t = jnp.pad(z, ((0, pad), (0, 0))).T          # (in_dim, B_pad)
    eps_t = jnp.pad(eps, ((0, pad), (0, 0))).T      # (to_z_dim, B_pad)

    max_feat = max([in_dim, 2 * to_z_dim] + [int(p.shape[0]) for p in params[0::2]])
    weight_bytes = sum(int(p.size) * p.dtype.itemsize for p in params)
    tile_b = _choose_tile_b(B_pad, in_dim, to_z_dim, max_feat,
                            io_itemsize=z.dtype.itemsize, weight_bytes=weight_bytes)
    grid = (B_pad // tile_b,)

    def col_spec(d):
        return pl.BlockSpec((d, tile_b), lambda i: (0, i))

    def resident_spec(p):
        return pl.BlockSpec(p.shape, lambda i: (0, 0))

    in_specs = ([col_spec(in_dim)]
                + [resident_spec(p) for p in params]
                + [col_spec(to_z_dim)])
    out_spec = pl.BlockSpec((3 * to_z_dim, tile_b), lambda i: (0, i))
    out_shape = jax.ShapeDtypeStruct((3 * to_z_dim, B_pad), jnp.float32)

    # Advisory cost estimate: this kernel is HBM-bound at these feature widths.
    mm_flops = 2 * B_pad * sum(int(p.shape[0]) * int(p.shape[1]) for p in params[0::2])
    io_bytes = (int(z_t.size) * z_t.dtype.itemsize
                + int(eps_t.size) * eps_t.dtype.itemsize
                + 3 * to_z_dim * B_pad * 4
                + weight_bytes)
    cost = pl.CostEstimate(flops=int(mm_flops),
                           transcendentals=int(B_pad * to_z_dim),
                           bytes_accessed=int(io_bytes))

    kernel = _make_kernel(num_layers, to_z_dim)
    out = pl.pallas_call(
        kernel,
        out_shape=out_shape,
        grid_spec=pltpu.PrefetchScalarGridSpec(
            num_scalar_prefetch=0,
            grid=grid,
            in_specs=in_specs,
            out_specs=out_spec,
        ),
        compiler_params=pltpu.CompilerParams(
            dimension_semantics=("parallel",)),   # megacore-shard the batch on v7x
        cost_estimate=cost,
    )(z_t, *params, eps_t)

    # Split the fused feature-major output and drop the batch padding.
    mu = out[:to_z_dim, :B].T
    log_sig = out[to_z_dim:2 * to_z_dim, :B].T
    zi = out[2 * to_z_dim:, :B].T
    return mu, log_sig, zi


def init_params(key, input_z_dim, to_z_dim, nif, num_layers):
    """Parameter init matching the PyTorch module's shapes and nn.Linear layout:
    W:(out, in), b:(out,), uniform(-1/sqrt(in), 1/sqrt(in))."""
    params = []
    d_in = input_z_dim
    layer_dims = [nif] * num_layers + [to_z_dim * 2]
    for d_out in layer_dims:
        key, kw, kb = jax.random.split(key, 3)
        bound = 1.0 / (d_in ** 0.5)
        w = jax.random.uniform(kw, (d_out, d_in), jnp.float32, -bound, bound)
        b = jax.random.uniform(kb, (d_out,), jnp.float32, -bound, bound)
        params += [w, b]
        d_in = d_out
    return tuple(params)


def prepare_params(torch_layout_params):
    """One-time (outside jit) cast to kernel dtypes/shapes: bf16 W (out, in),
    f32 b reshaped to (out, 1) for lane-broadcast in the feature-major layout."""
    prepared = []
    for k, p in enumerate(torch_layout_params):
        if k % 2 == 0:
            prepared.append(jnp.asarray(p, jnp.bfloat16))
        else:
            prepared.append(jnp.asarray(p, jnp.float32).reshape(-1, 1))
    return tuple(prepared)


def reference_forward(z, params, eps, num_layers, to_z_dim):
    """Pure-JAX f32 reference (nn.Linear layout params) for correctness checking."""
    h = z.astype(jnp.float32)
    idx = 0
    for _ in range(num_layers):
        w, b = params[idx], params[idx + 1]
        idx += 2
        h = h @ w.T + b
        h = jnp.where(h >= 0.0, h, 0.2 * h)
    w_out, b_out = params[idx], params[idx + 1]
    logits = h @ w_out.T + b_out
    mu, log_sig = logits[:, :to_z_dim], logits[:, to_z_dim:]
    zi = mu + jnp.exp(log_sig) * eps.astype(jnp.float32)
    return mu, log_sig, zi


if __name__ == "__main__":
    # Small shapes consistent with the module:
    batch = 8
    input_z_dim = 16
    to_z_dim = 8
    nif = 32
    num_layers = 2

    key = jax.random.PRNGKey(0)
    key, kz, keps, kparams = jax.random.split(key, 4)

    z = jax.random.normal(kz, (batch, input_z_dim), jnp.float32)
    eps = jax.random.normal(keps, (batch, to_z_dim), jnp.float32)

    torch_params = init_params(kparams, input_z_dim, to_z_dim, nif, num_layers)
    kernel_params = prepare_params(torch_params)   # pre-cast once, outside jit

    mu, log_sig, zi = net_izi_mlp_forward(
        z, kernel_params, eps, num_layers=num_layers, to_z_dim=to_z_dim
    )
    jax.block_until_ready((mu, log_sig, zi))

    mu_ref, log_sig_ref, zi_ref = reference_forward(
        z, torch_params, eps, num_layers, to_z_dim)

    assert mu.shape == (batch, to_z_dim)
    assert log_sig.shape == (batch, to_z_dim)
    assert zi.shape == (batch, to_z_dim)
    # bf16 matmul path vs f32 reference: loosened tolerances.
    assert jnp.allclose(mu, mu_ref, atol=5e-2, rtol=5e-2)
    assert jnp.allclose(log_sig, log_sig_ref, atol=5e-2, rtol=5e-2)
    assert jnp.allclose(zi, zi_ref, atol=5e-2, rtol=5e-2)

    print("KERNEL_OK")
</pallas_src>

<mosaic_0001>
module attributes {stable_mosaic.version = 11 : i64} {
  func.func @kernel(%arg0: i32, %arg1: memref<16x128xf32, #tpu.memory_space<vmem>>, %arg2: memref<32x16xbf16, #tpu.memory_space<vmem>>, %arg3: memref<32x1xf32, #tpu.memory_space<vmem>>, %arg4: memref<32x32xbf16, #tpu.memory_space<vmem>>, %arg5: memref<32x1xf32, #tpu.memory_space<vmem>>, %arg6: memref<16x32xbf16, #tpu.memory_space<vmem>>, %arg7: memref<16x1xf32, #tpu.memory_space<vmem>>, %arg8: memref<8x128xf32, #tpu.memory_space<vmem>>, %arg9: memref<24x128xf32, #tpu.memory_space<vmem>>) attributes {dimension_semantics = [#tpu.dimension_semantics<parallel>], iteration_bounds = array<i64: 1>, scalar_prefetch = 0 : i64, scratch_operands = 0 : i64, tpu.core_type = #tpu.core_type<tc>, window_params = [{transform_indices = @transform_0, window_bounds = array<i64: 16, 128>}, {pipeline_mode = #tpu.pipeline_mode<synchronous>, transform_indices = @transform_1, window_bounds = array<i64: 32, 16>}, {pipeline_mode = #tpu.pipeline_mode<synchronous>, transform_indices = @transform_2, window_bounds = array<i64: 32, 1>}, {pipeline_mode = #tpu.pipeline_mode<synchronous>, transform_indices = @transform_3, window_bounds = array<i64: 32, 32>}, {pipeline_mode = #tpu.pipeline_mode<synchronous>, transform_indices = @transform_4, window_bounds = array<i64: 32, 1>}, {pipeline_mode = #tpu.pipeline_mode<synchronous>, transform_indices = @transform_5, window_bounds = array<i64: 16, 32>}, {pipeline_mode = #tpu.pipeline_mode<synchronous>, transform_indices = @transform_6, window_bounds = array<i64: 16, 1>}, {transform_indices = @transform_7, window_bounds = array<i64: 8, 128>}, {transform_indices = @transform_8, window_bounds = array<i64: 24, 128>}]} {
    %c0 = arith.constant 0 : index
    %c0_0 = arith.constant 0 : index
    %0 = vector.load %arg1[%c0, %c0_0] : memref<16x128xf32, #tpu.memory_space<vmem>>, vector<16x128xf32>
    %1 = arith.truncf %0 : vector<16x128xf32> to vector<16x128xbf16>
    %c0_1 = arith.constant 0 : index
    %c0_2 = arith.constant 0 : index
    %2 = vector.load %arg2[%c0_1, %c0_2] : memref<32x16xbf16, #tpu.memory_space<vmem>>, vector<32x16xbf16>
    %c0_3 = arith.constant 0 : index
    %c0_4 = arith.constant 0 : index
    %3 = vector.load %arg3[%c0_3, %c0_4] : memref<32x1xf32, #tpu.memory_space<vmem>>, vector<32x1xf32>
    %cst = arith.constant dense<0.000000e+00> : vector<32x128xf32>
    %4 = tpu.matmul %2, %1, %cst {dimension_numbers = #tpu.dot_dimension_numbers<[1], [0], [0], [1], [0, 0, 1, 1], [], []>} : vector<32x16xbf16>, vector<16x128xbf16>, vector<32x128xf32> -> vector<32x128xf32>
    %5 = vector.broadcast %3 : vector<32x1xf32> to vector<32x128xf32>
    %6 = arith.addf %4, %5 : vector<32x128xf32>
    %7 = arith.truncf %6 : vector<32x128xf32> to vector<32x128xbf16>
    %cst_5 = arith.constant 0.000000e+00 : bf16
    %8 = vector.broadcast %cst_5 : bf16 to vector<32x128xbf16>
    %9 = arith.cmpf oge, %7, %8 : vector<32x128xbf16>
    %cst_6 = arith.constant 2.001950e-01 : bf16
    %10 = vector.broadcast %cst_6 : bf16 to vector<32x128xbf16>
    %11 = arith.mulf %10, %7 : vector<32x128xbf16>
    %12 = arith.select %9, %7, %11 : vector<32x128xi1>, vector<32x128xbf16>
    %c0_7 = arith.constant 0 : index
    %c0_8 = arith.constant 0 : index
    %13 = vector.load %arg4[%c0_7, %c0_8] : memref<32x32xbf16, #tpu.memory_space<vmem>>, vector<32x32xbf16>
    %c0_9 = arith.constant 0 : index
    %c0_10 = arith.constant 0 : index
    %14 = vector.load %arg5[%c0_9, %c0_10] : memref<32x1xf32, #tpu.memory_space<vmem>>, vector<32x1xf32>
    %cst_11 = arith.constant dense<0.000000e+00> : vector<32x128xf32>
    %15 = tpu.matmul %13, %12, %cst_11 {dimension_numbers = #tpu.dot_dimension_numbers<[1], [0], [0], [1], [0, 0, 1, 1], [], []>} : vector<32x32xbf16>, vector<32x128xbf16>, vector<32x128xf32> -> vector<32x128xf32>
    %16 = vector.broadcast %14 : vector<32x1xf32> to vector<32x128xf32>
    %17 = arith.addf %15, %16 : vector<32x128xf32>
    %18 = arith.truncf %17 : vector<32x128xf32> to vector<32x128xbf16>
    %cst_12 = arith.constant 0.000000e+00 : bf16
    %19 = vector.broadcast %cst_12 : bf16 to vector<32x128xbf16>
    %20 = arith.cmpf oge, %18, %19 : vector<32x128xbf16>
    %cst_13 = arith.constant 2.001950e-01 : bf16
    %21 = vector.broadcast %cst_13 : bf16 to vector<32x128xbf16>
    %22 = arith.mulf %21, %18 : vector<32x128xbf16>
    %23 = arith.select %20, %18, %22 : vector<32x128xi1>, vector<32x128xbf16>
    %c0_14 = arith.constant 0 : index
    %c0_15 = arith.constant 0 : index
    %24 = vector.load %arg6[%c0_14, %c0_15] : memref<16x32xbf16, #tpu.memory_space<vmem>>, vector<16x32xbf16>
    %c0_16 = arith.constant 0 : index
    %c0_17 = arith.constant 0 : index
    %25 = vector.load %arg7[%c0_16, %c0_17] : memref<16x1xf32, #tpu.memory_space<vmem>>, vector<16x1xf32>
    %cst_18 = arith.constant dense<0.000000e+00> : vector<16x128xf32>
    %26 = tpu.matmul %24, %23, %cst_18 {dimension_numbers = #tpu.dot_dimension_numbers<[1], [0], [0], [1], [0, 0, 1, 1], [], []>} : vector<16x32xbf16>, vector<32x128xbf16>, vector<16x128xf32> -> vector<16x128xf32>
    %27 = vector.broadcast %25 : vector<16x1xf32> to vector<16x128xf32>
    %28 = arith.addf %26, %27 : vector<16x128xf32>
    %29 = vector.extract_strided_slice %28 {offsets = [0, 0], sizes = [8, 128], strides = [1, 1]} : vector<16x128xf32> to vector<8x128xf32>
    %30 = vector.extract_strided_slice %28 {offsets = [8, 0], sizes = [8, 128], strides = [1, 1]} : vector<16x128xf32> to vector<8x128xf32>
    %c0_19 = arith.constant 0 : index
    %c0_20 = arith.constant 0 : index
    %31 = vector.load %arg8[%c0_19, %c0_20] : memref<8x128xf32, #tpu.memory_space<vmem>>, vector<8x128xf32>
    %32 = math.exp %30 : vector<8x128xf32>
    %33 = arith.mulf %32, %31 : vector<8x128xf32>
    %34 = arith.addf %29, %33 : vector<8x128xf32>
    %35 = tpu.concatenate %28, %34 in 0 : vector<16x128xf32>, vector<8x128xf32> -> vector<24x128xf32>
    %c0_21 = arith.constant 0 : index
    %c0_22 = arith.constant 0 : index
    %36 = vector.load %arg9[%c0_21, %c0_22] : memref<24x128xf32, #tpu.memory_space<vmem>>, vector<24x128xf32>
    tpu.vector_store %arg9[%c0_21, %c0_22], %35 {strides = array<i32>} : memref<24x128xf32, #tpu.memory_space<vmem>>, vector<24x128xf32>,
    return
  }
  func.func @transform_0(%arg0: i32) -> (i32, i32) {
    %c0_i32 = arith.constant 0 : i32
    %c0_i32_0 = arith.constant 0 : i32
    return %c0_i32, %arg0 : i32, i32
  }
  func.func @transform_1(%arg0: i32) -> (i32, i32) {
    %c0_i32 = arith.constant 0 : i32
    %c0_i32_0 = arith.constant 0 : i32
    %c0_i32_1 = arith.constant 0 : i32
    return %c0_i32, %c0_i32_0 : i32, i32
  }
  func.func @transform_2(%arg0: i32) -> (i32, i32) {
    %c0_i32 = arith.constant 0 : i32
    %c0_i32_0 = arith.constant 0 : i32
    %c0_i32_1 = arith.constant 0 : i32
    return %c0_i32, %c0_i32_0 : i32, i32
  }
  func.func @transform_3(%arg0: i32) -> (i32, i32) {
    %c0_i32 = arith.constant 0 : i32
    %c0_i32_0 = arith.constant 0 : i32
    %c0_i32_1 = arith.constant 0 : i32
    return %c0_i32, %c0_i32_0 : i32, i32
  }
  func.func @transform_4(%arg0: i32) -> (i32, i32) {
    %c0_i32 = arith.constant 0 : i32
    %c0_i32_0 = arith.constant 0 : i32
    %c0_i32_1 = arith.constant 0 : i32
    return %c0_i32, %c0_i32_0 : i32, i32
  }
  func.func @transform_5(%arg0: i32) -> (i32, i32) {
    %c0_i32 = arith.constant 0 : i32
    %c0_i32_0 = arith.constant 0 : i32
    %c0_i32_1 = arith.constant 0 : i32
    return %c0_i32, %c0_i32_0 : i32, i32
  }
  func.func @transform_6(%arg0: i32) -> (i32, i32) {
    %c0_i32 = arith.constant 0 : i32
    %c0_i32_0 = arith.constant 0 : i32
    %c0_i32_1 = arith.constant 0 : i32
    return %c0_i32, %c0_i32_0 : i32, i32
  }
  func.func @transform_7(%arg0: i32) -> (i32, i32) {
    %c0_i32 = arith.constant 0 : i32
    %c0_i32_0 = arith.constant 0 : i32
    return %c0_i32, %arg0 : i32, i32
  }
  func.func @transform_8(%arg0: i32) -> (i32, i32) {
    %c0_i32 = arith.constant 0 : i32
    %c0_i32_0 = arith.constant 0 : i32
    return %c0_i32, %arg0 : i32, i32
  }
}

</mosaic_0001>

<llo_original>
// kernel: net_izi_mlp_forward.1
$region0: #{net_izi_mlp_forward.1}
  #allocation0 [shape = 'u32[]', space=smem, size = 0x4, offset = 0x4, fixed_abs, tag = 'smem constant byte address 0x4 - core index']
  #allocation1 [shape = 'u32[144,128]{1,0:T(1,128)}', space=vmem, size = 0x12000, scoped, tag = 'internal scratch']
  %s0 = inlined_call_operand.vmem [shape: f32[16,128], index: 0, kind: input, shape index: {}]
  %s1 = inlined_call_operand.vmem [shape: bf16[32,16], index: 1, kind: input, shape index: {}]
  %s2 = inlined_call_operand.vmem [shape: f32[32,1], index: 2, kind: input, shape index: {}]
  %s3 = inlined_call_operand.vmem [shape: bf16[32,32], index: 3, kind: input, shape index: {}]
  %s4 = inlined_call_operand.vmem [shape: f32[32,1], index: 4, kind: input, shape index: {}]
  %s5 = inlined_call_operand.vmem [shape: bf16[16,32], index: 5, kind: input, shape index: {}]
  %s6 = inlined_call_operand.vmem [shape: f32[16,1], index: 6, kind: input, shape index: {}]
  %s7 = inlined_call_operand.vmem [shape: f32[8,128], index: 7, kind: input, shape index: {}]
  %s8 = inlined_call_operand.vmem [shape: f32[24,128], index: 8, kind: output, shape index: {}]
  %s9 = sld [smem:[#allocation0]]
  $region42: #{net_izi_mlp_forward.1} parent=0
    _
  %s11 = ssub.s32 1, %s9
  %s12 = scalar_select 0, %s11, %s9
  // Predicated region
  $region2: #{net_izi_mlp_forward.1} parent=0 // pred_check
    _
  $region3: #{net_izi_mlp_forward.1} parent=0 // pred_check_branch
    %14 = sbr.rel (0) target = $region5
  $region4: #{net_izi_mlp_forward.1} parent=0 // pred_region
    _
  $region5: #{net_izi_mlp_forward.1} parent=0 // pred_fallthru
    _
  // Predicated region
  $region6: #{net_izi_mlp_forward.1} parent=0 // pred_check
    _
  $region7: #{net_izi_mlp_forward.1} parent=0 // pred_check_branch
    %16 = sbr.rel (0) target = $region9
  $region8: #{net_izi_mlp_forward.1} parent=0 // pred_region
    _
  $region9: #{net_izi_mlp_forward.1} parent=0 // pred_fallthru
    _
  // Predicated region
  $region10: #{net_izi_mlp_forward.1} parent=0 // pred_check
    _
  $region11: #{net_izi_mlp_forward.1} parent=0 // pred_check_branch
    %18 = sbr.rel (0) target = $region13
  $region12: #{net_izi_mlp_forward.1} parent=0 // pred_region
    _
  $region13: #{net_izi_mlp_forward.1} parent=0 // pred_fallthru
    _
  // Predicated region
  $region14: #{net_izi_mlp_forward.1} parent=0 // pred_check
    _
  $region15: #{net_izi_mlp_forward.1} parent=0 // pred_check_branch
    %20 = sbr.rel (0) target = $region17
  $region16: #{net_izi_mlp_forward.1} parent=0 // pred_region
    _
  $region17: #{net_izi_mlp_forward.1} parent=0 // pred_fallthru
    _
  // Predicated region
  $region18: #{net_izi_mlp_forward.1} parent=0 // pred_check
    _
  $region19: #{net_izi_mlp_forward.1} parent=0 // pred_check_branch
    %22 = sbr.rel (0) target = $region21
  $region20: #{net_izi_mlp_forward.1} parent=0 // pred_region
    _
  $region21: #{net_izi_mlp_forward.1} parent=0 // pred_fallthru
    _
  // Predicated region
  $region22: #{net_izi_mlp_forward.1} parent=0 // pred_check
    _
  $region23: #{net_izi_mlp_forward.1} parent=0 // pred_check_branch
    %24 = sbr.rel (0) target = $region25
  $region24: #{net_izi_mlp_forward.1} parent=0 // pred_region
    _
  $region25: #{net_izi_mlp_forward.1} parent=0 // pred_fallthru
    _
  // Predicated region
  $region26: #{net_izi_mlp_forward.1} parent=0 // pred_check
    _
  $region27: #{net_izi_mlp_forward.1} parent=0 // pred_check_branch
    %26 = sbr.rel (0) target = $region29
  $region28: #{net_izi_mlp_forward.1} parent=0 // pred_region
    _
  $region29: #{net_izi_mlp_forward.1} parent=0 // pred_fallthru
    _
  // Predicated region
  $region30: #{net_izi_mlp_forward.1} parent=0 // pred_check
    _
  $region31: #{net_izi_mlp_forward.1} parent=0 // pred_check_branch
    %28 = sbr.rel (0) target = $region33
  $region32: #{net_izi_mlp_forward.1} parent=0 // pred_region
    _
  $region33: #{net_izi_mlp_forward.1} parent=0 // pred_fallthru
    _
  %v31 = vld [vmem:[%s0] sm:$0xff]
  %v32 = vld [vmem:[%s0 + $0x8] sm:$0xff]
  %v33 = vpack.c.bf16 %v32, %v31
  %v34 = vld [vmem:[%s1] sm:$0xf]
  %v35 = vld [vmem:[%s1 + $0x4] sm:$0xf]
  %v36 = vld [vmem:[%s1 + $0x8] sm:$0xf]
  %v37 = vld [vmem:[%s1 + $0xc] sm:$0xf]
  %v38 = vld [vmem:[%s2] sm:$0xff]
  %v39 = vld [vmem:[%s2 + $0x8] sm:$0xff]
  %v40 = vld [vmem:[%s2 + $0x10] sm:$0xff]
  %v41 = vld [vmem:[%s2 + $0x18] sm:$0xff]
  %43 = vset.pattern.permute.xlu0 0
  %44 = vperm.xlu0 %43, %v38
  %v45 = vpop.permute.xlu0 %44
  %48 = vset.pattern.permute.xlu0 0
  %49 = vperm.xlu0 %48, %v39
  %v50 = vpop.permute.xlu0 %49
  %53 = vset.pattern.permute.xlu0 0
  %54 = vperm.xlu0 %53, %v40
  %v55 = vpop.permute.xlu0 %54
  %58 = vset.pattern.permute.xlu0 0
  %59 = vperm.xlu0 %58, %v41
  %v60 = vpop.permute.xlu0 %59
  %v66 = vunpack.c.l.b16 %v34
  %v67 = vunpack.c.l.b16 %v35
  %v68 = vunpack.c.l.b16 %v36
  %v69 = vunpack.c.l.b16 %v37
  %v70 = vpack.c.b16 %v67, %v66
  %v71 = vpack.c.b16 %v69, %v68
  %vm72 = vcmask 130048
  %v74 = vsel %vm72, %v70, 0
  %v77 = vsel %vm72, %v71, 0
  %79 = vmatprep.subr.bf16.mxu0 0
  %80 = vmatpush1.bf16.msra.mxu0 %v33
  %81 = vmatprep.subr.bf16.mxu0 0
  %82 = vmatpush1.bf16.msra.mxu0 0
  %83 = vmatprep.subr.bf16.mxu0 0
  %84 = vmatpush1.bf16.msra.mxu0 0
  %85 = vmatprep.subr.bf16.mxu0 0
  %86 = vmatpush1.bf16.msra.mxu0 0
  %87 = vmatprep.subr.bf16.mxu0 0
  %88 = vmatpush1.bf16.msra.mxu0 0
  %89 = vmatprep.subr.bf16.mxu0 0
  %90 = vmatpush1.bf16.msra.mxu0 0
  %91 = vmatprep.subr.bf16.mxu0 0
  %92 = vmatpush1.bf16.msra.mxu0 0
  %93 = vmatprep.subr.bf16.mxu0 0
  %94 = vmatpush1.bf16.msra.mxu0 0
  %95 = vmatprep.subr.bf16.mxu0 0
  %96 = vmatpush1.bf16.msra.mxu0 0
  %97 = vmatprep.subr.bf16.mxu0 0
  %98 = vmatpush1.bf16.msra.mxu0 0
  %99 = vmatprep.subr.bf16.mxu0 0
  %100 = vmatpush1.bf16.msra.mxu0 0
  %101 = vmatprep.subr.bf16.mxu0 0
  %102 = vmatpush1.bf16.msra.mxu0 0
  %103 = vmatprep.subr.bf16.mxu0 0
  %104 = vmatpush1.bf16.msra.mxu0 0
  %105 = vmatprep.subr.bf16.mxu0 0
  %106 = vmatpush1.bf16.msra.mxu0 0
  %107 = vmatprep.subr.bf16.mxu0 0
  %108 = vmatpush1.bf16.msra.mxu0 0
  %109 = vmatprep.subr.bf16.mxu0 0
  %110 = vmatpush1.bf16.msra.mxu0 0
  %111 = vmatprep.mubr.bf16.mxu0 0
  %112 = vmatmul.mubr.bf16.gmra.mrb[0].mxu0 %v74
  %v113 = vpop.f32.mrb[0].mxu0
  %v114 = vadd.f32 %v45, %v113
  %v115 = vpop.f32.mrb[0].mxu0
  %v116 = vpop.f32.mrb[0].mxu0
  %v117 = vadd.f32 %v50, %v116
  %v118 = vpop.f32.mrb[0].mxu0
  %119 = vmatprep.mubr.bf16.mxu0 0
  %120 = vmatmul.mubr.bf16.gmra.mrb[0].mxu0 %v77
  %v121 = vpop.f32.mrb[0].mxu0
  %v122 = vadd.f32 %v55, %v121
  %v123 = vpop.f32.mrb[0].mxu0
  %v124 = vpop.f32.mrb[0].mxu0
  %v125 = vadd.f32 %v60, %v124
  %v126 = vpop.f32.mrb[0].mxu0
  %127 = vdwg.mxu0
  %v128 = vpack.c.bf16 %v117, %v114
  %v129 = vpack.c.bf16 %v125, %v122
  %vm130 = vcmp.ge.bf16.partialorder %v128, 0
  %vm131 = vcmp.ge.bf16.partialorder %v129, 0
  %v132 = vmul.bf16 %v128, 1045249613
  %v133 = vmul.bf16 %v129, 1045249613
  %v134 = vsel %vm130, %v128, %v132
  %v135 = vsel %vm131, %v129, %v133
  %v136 = vld [vmem:[%s3] sm:$0xf]
  %v137 = vld [vmem:[%s3 + $0x4] sm:$0xf]
  %v138 = vld [vmem:[%s3 + $0x8] sm:$0xf]
  %v139 = vld [vmem:[%s3 + $0xc] sm:$0xf]
  %v140 = vld [vmem:[%s4] sm:$0xff]
  %v141 = vld [vmem:[%s4 + $0x8] sm:$0xff]
  %v142 = vld [vmem:[%s4 + $0x10] sm:$0xff]
  %v143 = vld [vmem:[%s4 + $0x18] sm:$0xff]
  %145 = vset.pattern.permute.xlu0 0
  %146 = vperm.xlu0 %145, %v140
  %v147 = vpop.permute.xlu0 %146
  %150 = vset.pattern.permute.xlu0 0
  %151 = vperm.xlu0 %150, %v141
  %v152 = vpop.permute.xlu0 %151
  %155 = vset.pattern.permute.xlu0 0
  %156 = vperm.xlu0 %155, %v142
  %v157 = vpop.permute.xlu0 %156
  %160 = vset.pattern.permute.xlu0 0
  %161 = vperm.xlu0 %160, %v143
  %v162 = vpop.permute.xlu0 %161
  %v168 = vunpack.c.l.b16 %v136
  %v169 = vunpack.c.l.b16 %v137
  %v170 = vunpack.c.l.b16 %v138
  %v171 = vunpack.c.l.b16 %v139
  %v172 = vpack.c.b16 %v169, %v168
  %v173 = vpack.c.b16 %v171, %v170
  %vm174 = vcmask 261120
  %v176 = vsel %vm174, %v172, 0
  %v179 = vsel %vm174, %v173, 0
  %181 = vmatprep.subr.bf16.mxu0 0
  %182 = vmatpush1.bf16.msra.mxu0 %v134
  %183 = vmatprep.subr.bf16.mxu0 0
  %184 = vmatpush1.bf16.msra.mxu0 %v135
  %185 = vmatprep.subr.bf16.mxu0 0
  %186 = vmatpush1.bf16.msra.mxu0 0
  %187 = vmatprep.subr.bf16.mxu0 0
  %188 = vmatpush1.bf16.msra.mxu0 0
  %189 = vmatprep.subr.bf16.mxu0 0
  %190 = vmatpush1.bf16.msra.mxu0 0
  %191 = vmatprep.subr.bf16.mxu0 0
  %192 = vmatpush1.bf16.msra.mxu0 0
  %193 = vmatprep.subr.bf16.mxu0 0
  %194 = vmatpush1.bf16.msra.mxu0 0
  %195 = vmatprep.subr.bf16.mxu0 0
  %196 = vmatpush1.bf16.msra.mxu0 0
  %197 = vmatprep.subr.bf16.mxu0 0
  %198 = vmatpush1.bf16.msra.mxu0 0
  %199 = vmatprep.subr.bf16.mxu0 0
  %200 = vmatpush1.bf16.msra.mxu0 0
  %201 = vmatprep.subr.bf16.mxu0 0
  %202 = vmatpush1.bf16.msra.mxu0 0
  %203 = vmatprep.subr.bf16.mxu0 0
  %204 = vmatpush1.bf16.msra.mxu0 0
  %205 = vmatprep.subr.bf16.mxu0 0
  %206 = vmatpush1.bf16.msra.mxu0 0
  %207 = vmatprep.subr.bf16.mxu0 0
  %208 = vmatpush1.bf16.msra.mxu0 0
  %209 = vmatprep.subr.bf16.mxu0 0
  %210 = vmatpush1.bf16.msra.mxu0 0
  %211 = vmatprep.subr.bf16.mxu0 0
  %212 = vmatpush1.bf16.msra.mxu0 0
  %213 = vmatprep.mubr.bf16.mxu0 0
  %214 = vmatmul.mubr.bf16.gmra.mrb[0].mxu0 %v176
  %v215 = vpop.f32.mrb[0].mxu0
  %v216 = vadd.f32 %v147, %v215
  %v217 = vpop.f32.mrb[0].mxu0
  %v218 = vpop.f32.mrb[0].mxu0
  %v219 = vadd.f32 %v152, %v218
  %v220 = vpop.f32.mrb[0].mxu0
  %221 = vmatprep.mubr.bf16.mxu0 0
  %222 = vmatmul.mubr.bf16.gmra.mrb[0].mxu0 %v179
  %v223 = vpop.f32.mrb[0].mxu0
  %v224 = vadd.f32 %v157, %v223
  %v225 = vpop.f32.mrb[0].mxu0
  %v226 = vpop.f32.mrb[0].mxu0
  %v227 = vadd.f32 %v162, %v226
  %v228 = vpop.f32.mrb[0].mxu0
  %229 = vdwg.mxu0
  %v230 = vpack.c.bf16 %v219, %v216
  %v231 = vpack.c.bf16 %v227, %v224
  %vm232 = vcmp.ge.bf16.partialorder %v230, 0
  %vm233 = vcmp.ge.bf16.partialorder %v231, 0
  %v234 = vmul.bf16 %v230, 1045249613
  %v235 = vmul.bf16 %v231, 1045249613
  %v236 = vsel %vm232, %v230, %v234
  %v237 = vsel %vm233, %v231, %v235
  %v238 = vld [vmem:[%s5] sm:$0xf]
  %v239 = vld [vmem:[%s5 + $0x4] sm:$0xf]
  %v240 = vld [vmem:[%s6] sm:$0xff]
  %v241 = vld [vmem:[%s6 + $0x8] sm:$0xff]
  %243 = vset.pattern.permute.xlu0 0
  %244 = vperm.xlu0 %243, %v240
  %v245 = vpop.permute.xlu0 %244
  %248 = vset.pattern.permute.xlu0 0
  %249 = vperm.xlu0 %248, %v241
  %v250 = vpop.permute.xlu0 %249
  %v254 = vunpack.c.l.b16 %v238
  %v255 = vunpack.c.l.b16 %v239
  %v256 = vpack.c.b16 %v255, %v254
  %v258 = vsel %vm174, %v256, 0
  %260 = vmatprep.subr.bf16.mxu0 0
  %261 = vmatpush1.bf16.msra.mxu0 %v236
  %262 = vmatprep.subr.bf16.mxu0 0
  %263 = vmatpush1.bf16.msra.mxu0 %v237
  %264 = vmatprep.subr.bf16.mxu0 0
  %265 = vmatpush1.bf16.msra.mxu0 0
  %266 = vmatprep.subr.bf16.mxu0 0
  %267 = vmatpush1.bf16.msra.mxu0 0
  %268 = vmatprep.subr.bf16.mxu0 0
  %269 = vmatpush1.bf16.msra.mxu0 0
  %270 = vmatprep.subr.bf16.mxu0 0
  %271 = vmatpush1.bf16.msra.mxu0 0
  %272 = vmatprep.subr.bf16.mxu0 0
  %273 = vmatpush1.bf16.msra.mxu0 0
  %274 = vmatprep.subr.bf16.mxu0 0
  %275 = vmatpush1.bf16.msra.mxu0 0
  %276 = vmatprep.subr.bf16.mxu0 0
  %277 = vmatpush1.bf16.msra.mxu0 0
  %278 = vmatprep.subr.bf16.mxu0 0
  %279 = vmatpush1.bf16.msra.mxu0 0
  %280 = vmatprep.subr.bf16.mxu0 0
  %281 = vmatpush1.bf16.msra.mxu0 0
  %282 = vmatprep.subr.bf16.mxu0 0
  %283 = vmatpush1.bf16.msra.mxu0 0
  %284 = vmatprep.subr.bf16.mxu0 0
  %285 = vmatpush1.bf16.msra.mxu0 0
  %286 = vmatprep.subr.bf16.mxu0 0
  %287 = vmatpush1.bf16.msra.mxu0 0
  %288 = vmatprep.subr.bf16.mxu0 0
  %289 = vmatpush1.bf16.msra.mxu0 0
  %290 = vmatprep.subr.bf16.mxu0 0
  %291 = vmatpush1.bf16.msra.mxu0 0
  %292 = vmatprep.mubr.bf16.mxu0 0
  %293 = vmatmul.mubr.bf16.gmra.mrb[0].mxu0 %v258
  %v294 = vpop.f32.mrb[0].mxu0
  %v295 = vadd.f32 %v245, %v294
  %v296 = vpop.f32.mrb[0].mxu0
  %v297 = vpop.f32.mrb[0].mxu0
  %v298 = vadd.f32 %v250, %v297
  %v299 = vpop.f32.mrb[0].mxu0
  %300 = vdwg.mxu0
  %v301 = vld [vmem:[%s7] sm:$0xff]
  %v302 = vmul.f32 %v298, 1.442695
  %v303 = vpow.pop %v302
  %v304 = vmul.f32 %v303, %v301
  %v305 = vadd.f32 %v295, %v304
  %306 = vst [vmem:[%s8] sm:$0xff] %v295
  %307 = vst [vmem:[%s8 + $0x8] sm:$0xff] %v298
  %308 = vst [vmem:[%s8 + $0x10] sm:$0xff] %v305
  // Predicated region
  $region34: #{net_izi_mlp_forward.1} parent=0 // pred_check
    _
  $region35: #{net_izi_mlp_forward.1} parent=0 // pred_check_branch
    %310 = sbr.rel (0) target = $region37
  $region36: #{net_izi_mlp_forward.1} parent=0 // pred_region
    _
  $region37: #{net_izi_mlp_forward.1} parent=0 // pred_fallthru
    _
  // Predicated region
  $region38: #{net_izi_mlp_forward.1} parent=0 // pred_check
    _
  $region39: #{net_izi_mlp_forward.1} parent=0 // pred_check_branch
    %312 = sbr.rel (0) target = $region41
  $region40: #{net_izi_mlp_forward.1} parent=0 // pred_region
    _
  $region41: #{net_izi_mlp_forward.1} parent=0 // pred_fallthru
    _

</llo_original>
